<compile_context>
chip_gen: v7x
topology: tpu7x:2x2x1
jax: 0.10.0
libtpu: 0.0.40
codegen_flags: <defaults>
</compile_context>

<pallas_src>
import functools

import jax
import jax.numpy as jnp
from jax import lax
from jax.experimental import pallas as pl
from jax.experimental.pallas import tpu as pltpu


def _round_up(x, m):
    return ((x + m - 1) // m) * m


# --------------------------------------------------------------------------
# Kernel 1: L2-normalize rows and fold 1/sqrt(temperature) into the scale.
# --------------------------------------------------------------------------
def _normalize_kernel(f_ref, o_ref, *, inv_sqrt_temp):
    f = f_ref[...].astype(jnp.float32)                      # (tile, Dp)
    sumsq = jnp.sum(f * f, axis=1, keepdims=True)           # (tile, 1)
    # x / max(||x||, 1e-12) == x * rsqrt(max(sumsq, 1e-24))  (EUP rsqrt)
    inv = lax.rsqrt(jnp.maximum(sumsq, 1e-24)) * inv_sqrt_temp
    o_ref[...] = f * inv


# --------------------------------------------------------------------------
# Kernel 2: tiled similarity + online LSE + positive-pair accumulators.
# --------------------------------------------------------------------------
def _supcon_tile_kernel(fr_ref, fc_ref, labc_ref, labr_ref, out_ref,
                        m_sc, l_sc, s_sc, c_sc, *, n_valid, n_pad, tile):
    ri = pl.program_id(0)
    ci = pl.program_id(1)
    nci = pl.num_programs(1)

    @pl.when(ci == 0)
    def _init():
        m_sc[...] = jnp.full_like(m_sc, -jnp.inf)
        l_sc[...] = jnp.zeros_like(l_sc)
        s_sc[...] = jnp.zeros_like(s_sc)
        c_sc[...] = jnp.zeros_like(c_sc)

    # (tile, tile) similarity block on the MXU. Temperature is already folded
    # into the operand scale by the normalize pass.
    sim = lax.dot_general(
        fr_ref[...], fc_ref[...],
        dimension_numbers=(((1,), (1,)), ((), ())),
        preferred_element_type=jnp.float32,
    )

    # Global row/col indices of this tile (for diagonal + padding masks).
    iota_r = lax.broadcasted_iota(jnp.int32, (tile, tile), 0)
    iota_c = lax.broadcasted_iota(jnp.int32, (tile, tile), 1)
    row_g = ri * tile + iota_r
    col_g = ci * tile + iota_c
    not_diag = row_g != col_g

    # Positive mask: same label, not self, valid (non-padded) column.
    lab_eq = labc_ref[...] == labr_ref[...]            # (tile,1)==(1,tile)->(tile,tile)
    pos_b = jnp.logical_and(lab_eq, not_diag)

    if n_valid < n_pad:                                # static: only when padded
        col_valid = col_g < n_valid
        pos_b = jnp.logical_and(pos_b, col_valid)
        sim_lse = jnp.where(col_valid, sim, jnp.float32(-1e30))
    else:
        sim_lse = sim

    # Online log-sum-exp over the (unmasked) softmax denominator.
    m_prev = m_sc[...]
    m_new = jnp.maximum(m_prev, jnp.max(sim_lse, axis=1, keepdims=True))
    alpha = jnp.exp(m_prev - m_new)
    p = jnp.exp(sim_lse - m_new)
    l_sc[...] = alpha * l_sc[...] + jnp.sum(p, axis=1, keepdims=True)
    m_sc[...] = m_new

    # Positive-pair accumulators are plain linear sums (no rescaling needed).
    s_sc[...] += jnp.sum(jnp.where(pos_b, sim, 0.0), axis=1, keepdims=True)
    c_sc[...] += jnp.sum(pos_b.astype(jnp.float32), axis=1, keepdims=True)

    @pl.when(ci == nci - 1)
    def _finalize():
        # log(sum(exp(sim - max)) + 1e-12) + max   -- matches the reference.
        lse = m_sc[...] + jnp.log(l_sc[...] + 1e-12)
        cnt = c_sc[...]
        out_ref[...] = (s_sc[...] - cnt * lse) / (cnt + 1e-12)


# --------------------------------------------------------------------------
# Wrapper
# --------------------------------------------------------------------------
def supcon_loss(features, labels, temperature=0.07):
    """features: (N, D) float; labels: (N,) int -> scalar f32 loss."""
    N, D = features.shape

    # Pad N to a lane-friendly multiple; pick an MXU-native tile.
    n_pad = _round_up(N, 128)
    tile = 256 if (n_pad % 256 == 0) else 128          # 256 feeds v6e/v7x MXU fully
    d_pad = _round_up(D, 128)                          # K padded to full lanes

    f = features.astype(jnp.float32)
    f = jnp.pad(f, ((0, n_pad - N), (0, d_pad - D)))
    lab = jnp.pad(labels.astype(jnp.int32), (0, n_pad - N), constant_values=-1)
    lab_col = lab.reshape(n_pad, 1)
    lab_row = lab.reshape(1, n_pad)

    inv_sqrt_temp = float(temperature) ** -0.5

    # Pass 1: normalize (+ fold temperature), tiled over row blocks.
    fn = pl.pallas_call(
        functools.partial(_normalize_kernel, inv_sqrt_temp=inv_sqrt_temp),
        out_shape=jax.ShapeDtypeStruct((n_pad, d_pad), jnp.float32),
        grid=(n_pad // tile,),
        in_specs=[pl.BlockSpec((tile, d_pad), lambda i: (i, 0))],
        out_specs=pl.BlockSpec((tile, d_pad), lambda i: (i, 0)),
        compiler_params=pltpu.CompilerParams(
            dimension_semantics=("parallel",)),
    )(f)

    # Pass 2: flash-style tiled SupCon accumulation.
    grid = (n_pad // tile, n_pad // tile)
    mlpp = pl.pallas_call(
        functools.partial(_supcon_tile_kernel,
                          n_valid=N, n_pad=n_pad, tile=tile),
        out_shape=jax.ShapeDtypeStruct((n_pad, 1), jnp.float32),
        grid_spec=pltpu.PrefetchScalarGridSpec(
            num_scalar_prefetch=0,
            grid=grid,
            in_specs=[
                pl.BlockSpec((tile, d_pad), lambda ri, ci: (ri, 0)),  # row features
                pl.BlockSpec((tile, d_pad), lambda ri, ci: (ci, 0)),  # col features
                pl.BlockSpec((tile, 1),     lambda ri, ci: (ri, 0)),  # labels (col view)
                pl.BlockSpec((1, tile),     lambda ri, ci: (0, ci)),  # labels (row view)
            ],
            out_specs=pl.BlockSpec((tile, 1), lambda ri, ci: (ri, 0)),
            scratch_shapes=[pltpu.VMEM((tile, 1), jnp.float32)] * 4,  # m, l, S, C
        ),
        compiler_params=pltpu.CompilerParams(
            dimension_semantics=("parallel", "arbitrary"),
            vmem_limit_bytes=48 * 1024 * 1024,
        ),
    )(fn, fn, lab_col, lab_row)

    # Final O(N) reduction (drop padded rows), negated mean.
    return -jnp.mean(mlpp[:N, 0])


# --------------------------------------------------------------------------
# Pure-JAX reference mirroring the PyTorch forward.
# --------------------------------------------------------------------------
def _supcon_loss_ref(features, labels, temperature=0.07):
    f = features.astype(jnp.float32)
    fn = f / jnp.maximum(jnp.linalg.norm(f, axis=1, keepdims=True), 1e-12)
    sim = (fn @ fn.T) / temperature
    lab = labels.reshape(-1, 1)
    mask = (lab == lab.T).astype(jnp.float32)
    n = lab.shape[0]
    mask = mask * (1.0 - jnp.eye(n, dtype=jnp.float32))
    logits = sim - jnp.max(sim, axis=1, keepdims=True)
    log_prob = logits - jnp.log(jnp.sum(jnp.exp(logits), axis=1, keepdims=True) + 1e-12)
    mlpp = jnp.sum(mask * log_prob, axis=1) / (jnp.sum(mask, axis=1) + 1e-12)
    return -jnp.mean(mlpp)


if __name__ == "__main__":
    key = jax.random.PRNGKey(0)
    k_feat, k_lab = jax.random.split(key)

    N, D = 8, 32                                   # small shapes: batch=8, hidden=32
    features = jax.random.normal(k_feat, (N, D), dtype=jnp.float32)
    labels = jax.random.randint(k_lab, (N,), 0, 3, dtype=jnp.int32)

    loss = supcon_loss(features, labels, temperature=0.07)
    loss = jax.block_until_ready(loss)

    ref = _supcon_loss_ref(features, labels, temperature=0.07)
    assert jnp.allclose(loss, ref, rtol=1e-4, atol=1e-4), (loss, ref)

    print("KERNEL_OK")
</pallas_src>

<mosaic_0001>
module attributes {stable_mosaic.version = 11 : i64} {
  func.func @_normalize_kernel(%arg0: i32, %arg1: memref<128x128xf32, #tpu.memory_space<vmem>>, %arg2: memref<128x128xf32, #tpu.memory_space<vmem>>) attributes {dimension_semantics = [#tpu.dimension_semantics<parallel>], iteration_bounds = array<i64: 1>, scalar_prefetch = 0 : i64, scratch_operands = 0 : i64, tpu.core_type = #tpu.core_type<tc>, window_params = [{transform_indices = @transform_0, window_bounds = array<i64: 128, 128>}, {transform_indices = @transform_1, window_bounds = array<i64: 128, 128>}]} {
    %c0 = arith.constant 0 : index
    %c0_0 = arith.constant 0 : index
    %0 = vector.load %arg1[%c0, %c0_0] : memref<128x128xf32, #tpu.memory_space<vmem>>, vector<128x128xf32>
    %1 = arith.mulf %0, %0 : vector<128x128xf32>
    %cst = arith.constant dense<0.000000e+00> : vector<128xf32>
    %2 = vector.multi_reduction <add>, %1, %cst [1] : vector<128x128xf32> to vector<128xf32>
    %3 = vector.shape_cast %2 : vector<128xf32> to vector<128x1xf32>
    %cst_1 = arith.constant 1.000000e-24 : f32
    %4 = vector.broadcast %cst_1 : f32 to vector<128x1xf32>
    %5 = arith.maximumf %3, %4 : vector<128x1xf32>
    %6 = math.rsqrt %5 : vector<128x1xf32>
    %cst_2 = arith.constant 3.77964473 : f32
    %7 = vector.broadcast %cst_2 : f32 to vector<128x1xf32>
    %8 = arith.mulf %6, %7 : vector<128x1xf32>
    %9 = vector.broadcast %8 : vector<128x1xf32> to vector<128x128xf32>
    %10 = arith.mulf %0, %9 : vector<128x128xf32>
    %c0_3 = arith.constant 0 : index
    %c0_4 = arith.constant 0 : index
    %11 = vector.load %arg2[%c0_3, %c0_4] : memref<128x128xf32, #tpu.memory_space<vmem>>, vector<128x128xf32>
    tpu.vector_store %arg2[%c0_3, %c0_4], %10 {strides = array<i32>} : memref<128x128xf32, #tpu.memory_space<vmem>>, vector<128x128xf32>,
    return
  }
  func.func @transform_0(%arg0: i32) -> (i32, i32) {
    %c0_i32 = arith.constant 0 : i32
    %c0_i32_0 = arith.constant 0 : i32
    return %arg0, %c0_i32 : i32, i32
  }
  func.func @transform_1(%arg0: i32) -> (i32, i32) {
    %c0_i32 = arith.constant 0 : i32
    %c0_i32_0 = arith.constant 0 : i32
    return %arg0, %c0_i32 : i32, i32
  }
}

</mosaic_0001>

<llo_original>
// kernel: tpu_custom_call.1
$region0: #{tpu_custom_call.1}
  #allocation0 [shape = 'u32[]', space=smem, size = 0x4, offset = 0x4, fixed_abs, tag = 'smem constant byte address 0x4 - core index']
  #allocation1 [shape = 'u32[144,128]{1,0:T(1,128)}', space=vmem, size = 0x12000, scoped, tag = 'internal scratch']
  %s0 = inlined_call_operand.hbm [shape: f32[128,128], index: 0, kind: input, shape index: {}]
  %s1 = inlined_call_operand.hbm [shape: f32[128,128], index: 1, kind: output, shape index: {}]
  %s2 = sld [smem:[#allocation0]]
  $region18: #{tpu_custom_call.1} parent=0
    _
  %s4 = ssub.s32 1, %s2
  %s5 = scalar_select 0, %s4, %s2
  $region1: #{tpu_custom_call.1} parent=0
    #allocation2 [shape = 'u8[65536]{0}', space=vmem, size = 0x10000, scoped, tag = 'input window, operand 0, single buffered']
    #allocation3 [shape = 's32[1]{0}', space=sflag, size = 0x4, scoped, tag = 'scoped memory for tpu_custom_call.1']
    #allocation4 [shape = 's32[1]{0}', space=sflag, size = 0x4, scoped, tag = 'scoped memory for tpu_custom_call.1']
    #allocation5 [shape = 'u8[65536]{0}', space=vmem, size = 0x10000, scoped, tag = 'output window, operand 0, single buffered']
    %6 = vsyncpa [#allocation3], 0
    %7 = vsyncpa [#allocation4], 0
    // Predicated region
    $region2: #{tpu_custom_call.1} parent=1 // pred_check
      _
    $region3: #{tpu_custom_call.1} parent=1 // pred_check_branch
      %9 = sbr.rel (0) target = $region5
    $region4: #{tpu_custom_call.1} parent=1 // pred_region
      %s11 = ssub.s32 2048, 2048
      %12 = vsyncadd [#allocation3], %s11
      %s13 = sshll.u32 [#allocation2], 4
      %s14 = int_to_ptr.vmem [resolvable:$true] %s13
      %19 = dma.hbm_to_vmem [thread:$0]  %s0, 2048, %s14, [#allocation3], 128, 128, 8
    $region5: #{tpu_custom_call.1} parent=1 // pred_fallthru
      _
    // Predicated region
    $region6: #{tpu_custom_call.1} parent=1 // pred_check
      _
    $region7: #{tpu_custom_call.1} parent=1 // pred_check_branch
      %21 = sbr.rel (0) target = $region9
    $region8: #{tpu_custom_call.1} parent=1 // pred_region
      %22 = dma.done [#allocation3], 2048
    $region9: #{tpu_custom_call.1} parent=1 // pred_fallthru
      _
    %v23 = vld [vmem:[#allocation2] sm:$0xff]
    %v24 = vld [vmem:[#allocation2 + $0x8] sm:$0xff]
    %v25 = vld [vmem:[#allocation2 + $0x10] sm:$0xff]
    %v26 = vld [vmem:[#allocation2 + $0x18] sm:$0xff]
    %v27 = vld [vmem:[#allocation2 + $0x20] sm:$0xff]
    %v28 = vld [vmem:[#allocation2 + $0x28] sm:$0xff]
    %v29 = vld [vmem:[#allocation2 + $0x30] sm:$0xff]
    %v30 = vld [vmem:[#allocation2 + $0x38] sm:$0xff]
    %v31 = vld [vmem:[#allocation2 + $0x40] sm:$0xff]
    %v32 = vld [vmem:[#allocation2 + $0x48] sm:$0xff]
    %v33 = vld [vmem:[#allocation2 + $0x50] sm:$0xff]
    %v34 = vld [vmem:[#allocation2 + $0x58] sm:$0xff]
    %v35 = vld [vmem:[#allocation2 + $0x60] sm:$0xff]
    %v36 = vld [vmem:[#allocation2 + $0x68] sm:$0xff]
    %v37 = vld [vmem:[#allocation2 + $0x70] sm:$0xff]
    %v38 = vld [vmem:[#allocation2 + $0x78] sm:$0xff]
    %v39 = vmul.f32 %v23, %v23
    %v40 = vmul.f32 %v24, %v24
    %v41 = vmul.f32 %v25, %v25
    %v42 = vmul.f32 %v26, %v26
    %v43 = vmul.f32 %v27, %v27
    %v44 = vmul.f32 %v28, %v28
    %v45 = vmul.f32 %v29, %v29
    %v46 = vmul.f32 %v30, %v30
    %v47 = vmul.f32 %v31, %v31
    %v48 = vmul.f32 %v32, %v32
    %v49 = vmul.f32 %v33, %v33
    %v50 = vmul.f32 %v34, %v34
    %v51 = vmul.f32 %v35, %v35
    %v52 = vmul.f32 %v36, %v36
    %v53 = vmul.f32 %v37, %v37
    %v54 = vmul.f32 %v38, %v38
    %55 = vadd.xlane.f32.xlu0 %v39
    %v56 = vpop.xlane.xlu0 %55
    %57 = vadd.xlane.f32.xlu0 %v40
    %v58 = vpop.xlane.xlu0 %57
    %59 = vadd.xlane.f32.xlu0 %v41
    %v60 = vpop.xlane.xlu0 %59
    %61 = vadd.xlane.f32.xlu0 %v42
    %v62 = vpop.xlane.xlu0 %61
    %63 = vadd.xlane.f32.xlu0 %v43
    %v64 = vpop.xlane.xlu0 %63
    %65 = vadd.xlane.f32.xlu0 %v44
    %v66 = vpop.xlane.xlu0 %65
    %67 = vadd.xlane.f32.xlu0 %v45
    %v68 = vpop.xlane.xlu0 %67
    %69 = vadd.xlane.f32.xlu0 %v46
    %v70 = vpop.xlane.xlu0 %69
    %71 = vadd.xlane.f32.xlu0 %v47
    %v72 = vpop.xlane.xlu0 %71
    %73 = vadd.xlane.f32.xlu0 %v48
    %v74 = vpop.xlane.xlu0 %73
    %75 = vadd.xlane.f32.xlu0 %v49
    %v76 = vpop.xlane.xlu0 %75
    %77 = vadd.xlane.f32.xlu0 %v50
    %v78 = vpop.xlane.xlu0 %77
    %79 = vadd.xlane.f32.xlu0 %v51
    %v80 = vpop.xlane.xlu0 %79
    %81 = vadd.xlane.f32.xlu0 %v52
    %v82 = vpop.xlane.xlu0 %81
    %83 = vadd.xlane.f32.xlu0 %v53
    %v84 = vpop.xlane.xlu0 %83
    %85 = vadd.xlane.f32.xlu0 %v54
    %v86 = vpop.xlane.xlu0 %85
    %v87 = vmax.f32 %v56, 1e-24
    %v88 = vmax.f32 %v58, 1e-24
    %v89 = vmax.f32 %v60, 1e-24
    %v90 = vmax.f32 %v62, 1e-24
    %v91 = vmax.f32 %v64, 1e-24
    %v92 = vmax.f32 %v66, 1e-24
    %v93 = vmax.f32 %v68, 1e-24
    %v94 = vmax.f32 %v70, 1e-24
    %v95 = vmax.f32 %v72, 1e-24
    %v96 = vmax.f32 %v74, 1e-24
    %v97 = vmax.f32 %v76, 1e-24
    %v98 = vmax.f32 %v78, 1e-24
    %v99 = vmax.f32 %v80, 1e-24
    %v100 = vmax.f32 %v82, 1e-24
    %v101 = vmax.f32 %v84, 1e-24
    %v102 = vmax.f32 %v86, 1e-24
    %v103 = vrsqrt.pop %v87
    %v104 = vrsqrt.pop %v88
    %v105 = vrsqrt.pop %v89
    %v106 = vrsqrt.pop %v90
    %v107 = vrsqrt.pop %v91
    %v108 = vrsqrt.pop %v92
    %v109 = vrsqrt.pop %v93
    %v110 = vrsqrt.pop %v94
    %v111 = vrsqrt.pop %v95
    %v112 = vrsqrt.pop %v96
    %v113 = vrsqrt.pop %v97
    %v114 = vrsqrt.pop %v98
    %v115 = vrsqrt.pop %v99
    %v116 = vrsqrt.pop %v100
    %v117 = vrsqrt.pop %v101
    %v118 = vrsqrt.pop %v102
    %v119 = vmul.f32 %v103, 3.7796447
    %v120 = vmul.f32 %v104, 3.7796447
    %v121 = vmul.f32 %v105, 3.7796447
    %v122 = vmul.f32 %v106, 3.7796447
    %v123 = vmul.f32 %v107, 3.7796447
    %v124 = vmul.f32 %v108, 3.7796447
    %v125 = vmul.f32 %v109, 3.7796447
    %v126 = vmul.f32 %v110, 3.7796447
    %v127 = vmul.f32 %v111, 3.7796447
    %v128 = vmul.f32 %v112, 3.7796447
    %v129 = vmul.f32 %v113, 3.7796447
    %v130 = vmul.f32 %v114, 3.7796447
    %v131 = vmul.f32 %v115, 3.7796447
    %v132 = vmul.f32 %v116, 3.7796447
    %v133 = vmul.f32 %v117, 3.7796447
    %v134 = vmul.f32 %v118, 3.7796447
    %v135 = vmul.f32 %v23, %v119
    %v136 = vmul.f32 %v24, %v120
    %v137 = vmul.f32 %v25, %v121
    %v138 = vmul.f32 %v26, %v122
    %v139 = vmul.f32 %v27, %v123
    %v140 = vmul.f32 %v28, %v124
    %v141 = vmul.f32 %v29, %v125
    %v142 = vmul.f32 %v30, %v126
    %v143 = vmul.f32 %v31, %v127
    %v144 = vmul.f32 %v32, %v128
    %v145 = vmul.f32 %v33, %v129
    %v146 = vmul.f32 %v34, %v130
    %v147 = vmul.f32 %v35, %v131
    %v148 = vmul.f32 %v36, %v132
    %v149 = vmul.f32 %v37, %v133
    %v150 = vmul.f32 %v38, %v134
    %151 = vst [vmem:[#allocation5] sm:$0xff] %v135
    %152 = vst [vmem:[#allocation5 + $0x8] sm:$0xff] %v136
    %153 = vst [vmem:[#allocation5 + $0x10] sm:$0xff] %v137
    %154 = vst [vmem:[#allocation5 + $0x18] sm:$0xff] %v138
    %155 = vst [vmem:[#allocation5 + $0x20] sm:$0xff] %v139
    %156 = vst [vmem:[#allocation5 + $0x28] sm:$0xff] %v140
    %157 = vst [vmem:[#allocation5 + $0x30] sm:$0xff] %v141
    %158 = vst [vmem:[#allocation5 + $0x38] sm:$0xff] %v142
    %159 = vst [vmem:[#allocation5 + $0x40] sm:$0xff] %v143
    %160 = vst [vmem:[#allocation5 + $0x48] sm:$0xff] %v144
    %161 = vst [vmem:[#allocation5 + $0x50] sm:$0xff] %v145
    %162 = vst [vmem:[#allocation5 + $0x58] sm:$0xff] %v146
    %163 = vst [vmem:[#allocation5 + $0x60] sm:$0xff] %v147
    %164 = vst [vmem:[#allocation5 + $0x68] sm:$0xff] %v148
    %165 = vst [vmem:[#allocation5 + $0x70] sm:$0xff] %v149
    %166 = vst [vmem:[#allocation5 + $0x78] sm:$0xff] %v150
    // Predicated region
    $region10: #{tpu_custom_call.1} parent=1 // pred_check
      _
    $region11: #{tpu_custom_call.1} parent=1 // pred_check_branch
      %168 = sbr.rel (0) target = $region13
    $region12: #{tpu_custom_call.1} parent=1 // pred_region
      %s170 = ssub.s32 2048, 2048
      %171 = vsyncadd [#allocation4], %s170
      %s172 = sshll.u32 [#allocation5], 4
      %s173 = int_to_ptr.vmem [resolvable:$true] %s172
      %178 = dma.vmem_to_hbm [thread:$0]  %s173, 2048, %s1, [#allocation4], 128, 128, 8
    $region13: #{tpu_custom_call.1} parent=1 // pred_fallthru
      _
    // Predicated region
    $region14: #{tpu_custom_call.1} parent=1 // pred_check
      _
    $region15: #{tpu_custom_call.1} parent=1 // pred_check_branch
      %180 = sbr.rel (0) target = $region17
    $region16: #{tpu_custom_call.1} parent=1 // pred_region
      %181 = dma.done [#allocation4], 2048
    $region17: #{tpu_custom_call.1} parent=1 // pred_fallthru
      _
    %182 = vsyncpa [#allocation3], 1
    %183 = vsyncpa [#allocation4], 1

</llo_original>
